<compile_context>
chip_gen: v7x
topology: tpu7x:2x2x1
jax: 0.10.0
libtpu: 0.0.40
codegen_flags: <defaults>
</compile_context>

<pallas_src>
import jax
import jax.numpy as jnp
from jax import lax
from jax.experimental import pallas as pl
from jax.experimental.pallas import tpu as pltpu


def _round_up(x, m):
    return (x + m - 1) // m * m


# --------------------------------------------------------------------------
# Kernel 1: x = relu(h @ Wh + r @ Wr)          (tiny; grid over T tiles only)
# --------------------------------------------------------------------------
def _mlp_kernel(h_ref, r_ref, wh_ref, wr_ref, x_ref):
    # h_ref/r_ref : [tm, Dp]  bf16      wh_ref/wr_ref : [Dp, Dp]  bf16
    # x_ref       : [tm, Dp]  bf16
    acc = jnp.dot(h_ref[...], wh_ref[...], preferred_element_type=jnp.float32)
    acc = acc + jnp.dot(r_ref[...], wr_ref[...],
                        preferred_element_type=jnp.float32)
    x_ref[...] = jnp.maximum(acc, 0.0).astype(x_ref.dtype)


# --------------------------------------------------------------------------
# Kernel 2: s = x @ tail^T                     (hot; HBM-bound on tail + out)
# --------------------------------------------------------------------------
def _score_kernel(x_ref, tail_ref, out_ref):
    # x_ref    : [tm, Dp] bf16  -- changes with the inner (T) grid index
    # tail_ref : [tn, Dp] bf16  -- changes only with the outer (N) grid index,
    #                              so its DMA is skipped across the inner axis
    # out_ref  : [tm, tn] out_dtype
    s = lax.dot_general(
        x_ref[...], tail_ref[...],
        dimension_numbers=(((1,), (1,)), ((), ())),   # contract on D (q·kᵀ form)
        preferred_element_type=jnp.float32)           # MXU, f32 accumulate
    out_ref[...] = s.astype(out_ref.dtype)


# --------------------------------------------------------------------------
# Wrapper
# --------------------------------------------------------------------------
def decoder_sorce_forward(head_embedding, rel_embedding, tail_embedding,
                          triple, weight, *,
                          compute_dtype=jnp.bfloat16,
                          out_dtype=jnp.bfloat16):
    """weight: [D, 2D] (torch nn.Linear(2D, D, bias=False).weight layout).

    out_dtype defaults to bf16 (halves score writeback); pass jnp.float32 for
    exact torch-style output dtype.
    """
    D = head_embedding.shape[1]
    T = triple.shape[0]
    N = tail_embedding.shape[0]

    c_bytes = jnp.dtype(compute_dtype).itemsize
    o_bytes = jnp.dtype(out_dtype).itemsize

    # ---- glue: gather (plain JAX) ----
    h_emb = head_embedding[triple[:, 0]]            # [T, D]
    r_emb = rel_embedding[triple[:, 1]]             # [T, D]

    # ---- padding / tile sizing ----
    D_pad = _round_up(D, 128)
    tm = 128 if T <= 128 else 256                   # MXU-friendly M tile
    T_pad = _round_up(T, tm)
    grid_t = T_pad // tm

    # Generation-aware VMEM budget (v5e/v6e: 128 MiB phys, v7x: 64 MiB phys).
    try:
        vmem_phys = int(pltpu.get_tpu_info().vmem_capacity_bytes)
    except Exception:
        vmem_phys = 64 << 20                        # v7x is the smallest
    # Keep the double-buffered working set within v5e's 16 MiB default too.
    vmem_budget = min(vmem_phys // 4, 16 << 20)

    # Score-kernel double-buffered working set:
    #   2*tm*Dp*cb (x) + 2*tn*Dp*cb (tail) + 2*tm*tn*ob (out)
    fixed = 2 * tm * D_pad * c_bytes
    per_tn = 2 * D_pad * c_bytes + 2 * tm * o_bytes
    tn_max = max(256, ((vmem_budget - fixed) // per_tn) // 256 * 256)
    tn_max = min(tn_max, 4096, max(256, _round_up(N, 256)))

    # Pick tn (a 256-multiple): trade padded-column HBM waste vs. per-step
    # pipeline overhead (~0.35 us/step ~= 256 KiB of HBM-byte equivalents).
    STEP_OVERHEAD_BYTES = 256 * 1024
    col_bytes = D_pad * c_bytes + T_pad * o_bytes
    best = None
    cand = 256
    while cand <= tn_max:
        n_pad_c = _round_up(N, cand)
        steps = (n_pad_c // cand) * grid_t
        cost = (n_pad_c - N) * col_bytes + steps * STEP_OVERHEAD_BYTES
        if best is None or cost < best[0]:
            best = (cost, cand, n_pad_c)
        cand += 256
    _, tn, N_pad = best
    grid_n = N_pad // tn

    def pad2(a, rows, cols):
        return jnp.pad(a, ((0, rows - a.shape[0]), (0, cols - a.shape[1])))

    h_p = pad2(h_emb, T_pad, D_pad).astype(compute_dtype)            # [Tp, Dp]
    r_p = pad2(r_emb, T_pad, D_pad).astype(compute_dtype)            # [Tp, Dp]
    # torch weight [D, 2D] -> split halves, transpose, pad: x = h@Wh + r@Wr.
    w_h = pad2(weight[:, :D].T, D_pad, D_pad).astype(compute_dtype)  # [Dp, Dp]
    w_r = pad2(weight[:, D:].T, D_pad, D_pad).astype(compute_dtype)  # [Dp, Dp]
    tail = pad2(tail_embedding, N_pad, D_pad).astype(compute_dtype)  # [Np, Dp]

    # ---- kernel 1: MLP (negligible FLOPs/bytes) ----
    mlp_vmem = 2 * (3 * tm * D_pad + 2 * D_pad * D_pad) * c_bytes
    x = pl.pallas_call(
        _mlp_kernel,
        out_shape=jax.ShapeDtypeStruct((T_pad, D_pad), compute_dtype),
        grid_spec=pltpu.PrefetchScalarGridSpec(
            num_scalar_prefetch=0,
            grid=(grid_t,),
            in_specs=[
                pl.BlockSpec((tm, D_pad), lambda i: (i, 0)),       # h
                pl.BlockSpec((tm, D_pad), lambda i: (i, 0)),       # r
                pl.BlockSpec((D_pad, D_pad), lambda i: (0, 0)),    # Wh (resident)
                pl.BlockSpec((D_pad, D_pad), lambda i: (0, 0)),    # Wr (resident)
            ],
            out_specs=pl.BlockSpec((tm, D_pad), lambda i: (i, 0)),
        ),
        compiler_params=pltpu.CompilerParams(
            dimension_semantics=("parallel",),
            vmem_limit_bytes=int(min(max(mlp_vmem + (2 << 20), 16 << 20),
                                     60 << 20))),
        cost_estimate=pl.CostEstimate(
            flops=4 * T_pad * D_pad * D_pad,
            transcendentals=0,
            bytes_accessed=(3 * T_pad * D_pad + 2 * D_pad * D_pad) * c_bytes),
    )(h_p, r_p, w_h, w_r)

    # ---- kernel 2: scoring (tail streamed from HBM exactly once) ----
    score_vmem = (2 * (tm * D_pad + tn * D_pad) * c_bytes
                  + 2 * tm * tn * o_bytes)
    out = pl.pallas_call(
        _score_kernel,
        out_shape=jax.ShapeDtypeStruct((T_pad, N_pad), out_dtype),
        grid_spec=pltpu.PrefetchScalarGridSpec(
            num_scalar_prefetch=0,
            grid=(grid_n, grid_t),                    # N_tail OUTER, T INNER
            in_specs=[
                pl.BlockSpec((tm, D_pad), lambda j, i: (i, 0)),    # x
                pl.BlockSpec((tn, D_pad), lambda j, i: (j, 0)),    # tail rows
            ],
            out_specs=pl.BlockSpec((tm, tn), lambda j, i: (i, j)),
        ),
        compiler_params=pltpu.CompilerParams(
            dimension_semantics=("parallel", "parallel"),
            vmem_limit_bytes=int(min(max(score_vmem + (2 << 20), 16 << 20),
                                     60 << 20))),
        cost_estimate=pl.CostEstimate(
            flops=2 * T_pad * N_pad * D_pad,
            transcendentals=0,
            bytes_accessed=(N_pad * D_pad * c_bytes            # tail, read once
                            + grid_n * T_pad * D_pad * c_bytes  # x re-reads
                            + T_pad * N_pad * o_bytes)),        # score writeback
    )(x, tail)

    return out[:T, :N]


def _reference_forward(head_embedding, rel_embedding, tail_embedding,
                       triple, weight, compute_dtype=jnp.bfloat16,
                       out_dtype=jnp.bfloat16):
    # Mirrors the kernel's bf16 MXU feeds / f32 accumulation / out_dtype store.
    cast = lambda a: a.astype(compute_dtype).astype(jnp.float32)
    h_emb = cast(head_embedding[triple[:, 0]])
    r_emb = cast(rel_embedding[triple[:, 1]])
    hr = jnp.concatenate([h_emb, r_emb], axis=1)
    x = jnp.maximum(hr @ cast(weight).T, 0.0)
    x = cast(x)
    s = x @ cast(tail_embedding).T
    return s.astype(out_dtype).astype(jnp.float32)


if __name__ == "__main__":
    key = jax.random.PRNGKey(0)
    k1, k2, k3, k4, k5, k6 = jax.random.split(key, 6)

    h_dim = 32          # in_dim
    n_entities = 16
    n_relations = 8
    n_tails = 16
    n_triples = 8

    head_embedding = jax.random.normal(k1, (n_entities, h_dim), jnp.float32)
    rel_embedding = jax.random.normal(k2, (n_relations, h_dim), jnp.float32)
    tail_embedding = jax.random.normal(k3, (n_tails, h_dim), jnp.float32)

    triple = jnp.stack(
        [
            jax.random.randint(k4, (n_triples,), 0, n_entities),
            jax.random.randint(k5, (n_triples,), 0, n_relations),
        ],
        axis=1,
    )  # [T, 2] int32

    # deterministic Linear(2D -> D, bias=False) weight, torch layout [D, 2D]
    weight = (jax.random.normal(k6, (h_dim, 2 * h_dim), jnp.float32)
              * (1.0 / jnp.sqrt(2.0 * h_dim)))

    out = decoder_sorce_forward(head_embedding, rel_embedding,
                                tail_embedding, triple, weight)
    out = jax.block_until_ready(out)

    ref = _reference_forward(head_embedding, rel_embedding,
                             tail_embedding, triple, weight)
    assert out.shape == (n_triples, n_tails)
    assert jnp.allclose(out.astype(jnp.float32), ref, atol=2e-2, rtol=2e-2), (
        float(jnp.max(jnp.abs(out.astype(jnp.float32) - ref))))

    print("KERNEL_OK")
</pallas_src>

<mosaic_0001>
module attributes {stable_mosaic.version = 11 : i64} {
  func.func @_mlp_kernel(%arg0: i32, %arg1: memref<128x128xbf16, #tpu.memory_space<vmem>>, %arg2: memref<128x128xbf16, #tpu.memory_space<vmem>>, %arg3: memref<128x128xbf16, #tpu.memory_space<vmem>>, %arg4: memref<128x128xbf16, #tpu.memory_space<vmem>>, %arg5: memref<128x128xbf16, #tpu.memory_space<vmem>>) attributes {dimension_semantics = [#tpu.dimension_semantics<parallel>], iteration_bounds = array<i64: 1>, scalar_prefetch = 0 : i64, scratch_operands = 0 : i64, tpu.core_type = #tpu.core_type<tc>, window_params = [{transform_indices = @transform_0, window_bounds = array<i64: 128, 128>}, {transform_indices = @transform_1, window_bounds = array<i64: 128, 128>}, {pipeline_mode = #tpu.pipeline_mode<synchronous>, transform_indices = @transform_2, window_bounds = array<i64: 128, 128>}, {pipeline_mode = #tpu.pipeline_mode<synchronous>, transform_indices = @transform_3, window_bounds = array<i64: 128, 128>}, {transform_indices = @transform_4, window_bounds = array<i64: 128, 128>}]} {
    %c0 = arith.constant 0 : index
    %c0_0 = arith.constant 0 : index
    %0 = vector.load %arg1[%c0, %c0_0] : memref<128x128xbf16, #tpu.memory_space<vmem>>, vector<128x128xbf16>
    %c0_1 = arith.constant 0 : index
    %c0_2 = arith.constant 0 : index
    %1 = vector.load %arg3[%c0_1, %c0_2] : memref<128x128xbf16, #tpu.memory_space<vmem>>, vector<128x128xbf16>
    %cst = arith.constant dense<0.000000e+00> : vector<128x128xf32>
    %2 = tpu.matmul %0, %1, %cst {dimension_numbers = #tpu.dot_dimension_numbers<[1], [0], [0], [1], [0, 0, 1, 1], [], []>} : vector<128x128xbf16>, vector<128x128xbf16>, vector<128x128xf32> -> vector<128x128xf32>
    %c0_3 = arith.constant 0 : index
    %c0_4 = arith.constant 0 : index
    %3 = vector.load %arg2[%c0_3, %c0_4] : memref<128x128xbf16, #tpu.memory_space<vmem>>, vector<128x128xbf16>
    %c0_5 = arith.constant 0 : index
    %c0_6 = arith.constant 0 : index
    %4 = vector.load %arg4[%c0_5, %c0_6] : memref<128x128xbf16, #tpu.memory_space<vmem>>, vector<128x128xbf16>
    %cst_7 = arith.constant dense<0.000000e+00> : vector<128x128xf32>
    %5 = tpu.matmul %3, %4, %cst_7 {dimension_numbers = #tpu.dot_dimension_numbers<[1], [0], [0], [1], [0, 0, 1, 1], [], []>} : vector<128x128xbf16>, vector<128x128xbf16>, vector<128x128xf32> -> vector<128x128xf32>
    %6 = arith.addf %2, %5 : vector<128x128xf32>
    %cst_8 = arith.constant 0.000000e+00 : f32
    %7 = vector.broadcast %cst_8 : f32 to vector<128x128xf32>
    %8 = arith.maximumf %6, %7 : vector<128x128xf32>
    %9 = arith.truncf %8 : vector<128x128xf32> to vector<128x128xbf16>
    %c0_9 = arith.constant 0 : index
    %c0_10 = arith.constant 0 : index
    %10 = vector.load %arg5[%c0_9, %c0_10] : memref<128x128xbf16, #tpu.memory_space<vmem>>, vector<128x128xbf16>
    tpu.vector_store %arg5[%c0_9, %c0_10], %9 {strides = array<i32>} : memref<128x128xbf16, #tpu.memory_space<vmem>>, vector<128x128xbf16>,
    return
  }
  func.func @transform_0(%arg0: i32) -> (i32, i32) {
    %c0_i32 = arith.constant 0 : i32
    %c0_i32_0 = arith.constant 0 : i32
    return %arg0, %c0_i32 : i32, i32
  }
  func.func @transform_1(%arg0: i32) -> (i32, i32) {
    %c0_i32 = arith.constant 0 : i32
    %c0_i32_0 = arith.constant 0 : i32
    return %arg0, %c0_i32 : i32, i32
  }
  func.func @transform_2(%arg0: i32) -> (i32, i32) {
    %c0_i32 = arith.constant 0 : i32
    %c0_i32_0 = arith.constant 0 : i32
    %c0_i32_1 = arith.constant 0 : i32
    return %c0_i32, %c0_i32_0 : i32, i32
  }
  func.func @transform_3(%arg0: i32) -> (i32, i32) {
    %c0_i32 = arith.constant 0 : i32
    %c0_i32_0 = arith.constant 0 : i32
    %c0_i32_1 = arith.constant 0 : i32
    return %c0_i32, %c0_i32_0 : i32, i32
  }
  func.func @transform_4(%arg0: i32) -> (i32, i32) {
    %c0_i32 = arith.constant 0 : i32
    %c0_i32_0 = arith.constant 0 : i32
    return %arg0, %c0_i32 : i32, i32
  }
}

</mosaic_0001>

<llo_original>
// kernel: tpu_custom_call.1
$region0: #{tpu_custom_call.1}
  #allocation0 [shape = 'u32[]', space=smem, size = 0x4, offset = 0x4, fixed_abs, tag = 'smem constant byte address 0x4 - core index']
  #allocation1 [shape = 'u32[144,128]{1,0:T(1,128)}', space=vmem, size = 0x12000, scoped, tag = 'internal scratch']
  %s0 = inlined_call_operand.hbm [shape: bf16[128,128], index: 0, kind: input, shape index: {}]
  %s1 = inlined_call_operand.hbm [shape: bf16[128,128], index: 1, kind: input, shape index: {}]
  %s2 = inlined_call_operand.hbm [shape: bf16[128,128], index: 2, kind: input, shape index: {}]
  %s3 = inlined_call_operand.hbm [shape: bf16[128,128], index: 3, kind: input, shape index: {}]
  %s4 = inlined_call_operand.hbm [shape: bf16[128,128], index: 4, kind: output, shape index: {}]
  %s5 = sld [smem:[#allocation0]]
  $region42: #{tpu_custom_call.1} parent=0
    _
  %s7 = ssub.s32 1, %s5
  %s8 = scalar_select 0, %s7, %s5
  $region1: #{tpu_custom_call.1} parent=0
    #allocation2 [shape = 'u8[32768]{0}', space=vmem, size = 0x8000, scoped, tag = 'input window, operand 0, single buffered']
    #allocation3 [shape = 's32[1]{0}', space=sflag, size = 0x4, scoped, tag = 'scoped memory for tpu_custom_call.1']
    #allocation4 [shape = 's32[1]{0}', space=sflag, size = 0x4, scoped, tag = 'scoped memory for tpu_custom_call.1']
    #allocation5 [shape = 'u8[32768]{0}', space=vmem, size = 0x8000, scoped, tag = 'input window, operand 1, single buffered']
    #allocation6 [shape = 's32[1]{0}', space=sflag, size = 0x4, scoped, tag = 'scoped memory for tpu_custom_call.1']
    #allocation7 [shape = 'u8[32768]{0}', space=vmem, size = 0x8000, scoped, tag = 'input window, operand 2, single buffered']
    #allocation8 [shape = 'u8[32768]{0}', space=vmem, size = 0x8000, scoped, tag = 'input window, operand 3, single buffered']
    #allocation9 [shape = 's32[1]{0}', space=sflag, size = 0x4, scoped, tag = 'scoped memory for tpu_custom_call.1']
    #allocation10 [shape = 'u8[32768]{0}', space=vmem, size = 0x8000, scoped, tag = 'output window, operand 0, single buffered']
    %9 = vsyncpa [#allocation3], 0
    %10 = vsyncpa [#allocation6], 0
    %11 = vsyncpa [#allocation9], 0
    %12 = vsyncpa [#allocation4], 0
    // Predicated region
    $region2: #{tpu_custom_call.1} parent=1 // pred_check
      _
    $region3: #{tpu_custom_call.1} parent=1 // pred_check_branch
      %14 = sbr.rel (0) target = $region5
    $region4: #{tpu_custom_call.1} parent=1 // pred_region
      %s16 = ssub.s32 1024, 1024
      %17 = vsyncadd [#allocation3], %s16
      %s18 = sshll.u32 [#allocation2], 4
      %s19 = int_to_ptr.vmem [resolvable:$true] %s18
      %24 = dma.hbm_to_vmem [thread:$0]  %s0, 1024, %s19, [#allocation3], 64, 64, 4
    $region5: #{tpu_custom_call.1} parent=1 // pred_fallthru
      _
    // Predicated region
    $region6: #{tpu_custom_call.1} parent=1 // pred_check
      _
    $region7: #{tpu_custom_call.1} parent=1 // pred_check_branch
      %26 = sbr.rel (0) target = $region9
    $region8: #{tpu_custom_call.1} parent=1 // pred_region
      %s28 = ssub.s32 1024, 1024
      %29 = vsyncadd [#allocation6], %s28
      %s30 = sshll.u32 [#allocation5], 4
      %s31 = int_to_ptr.vmem [resolvable:$true] %s30
      %36 = dma.hbm_to_vmem [thread:$0]  %s1, 1024, %s31, [#allocation6], 64, 64, 4
    $region9: #{tpu_custom_call.1} parent=1 // pred_fallthru
      _
    // Predicated region
    $region10: #{tpu_custom_call.1} parent=1 // pred_check
      _
    $region11: #{tpu_custom_call.1} parent=1 // pred_check_branch
      %38 = sbr.rel (0) target = $region13
    $region12: #{tpu_custom_call.1} parent=1 // pred_region
      %s40 = ssub.s32 1024, 1024
      %41 = vsyncadd [#allocation6], %s40
      %s42 = sshll.u32 [#allocation7], 4
      %s43 = int_to_ptr.vmem [resolvable:$true] %s42
      %48 = dma.hbm_to_vmem [thread:$0]  %s2, 1024, %s43, [#allocation6], 64, 64, 4
    $region13: #{tpu_custom_call.1} parent=1 // pred_fallthru
      _
    // Predicated region
    $region14: #{tpu_custom_call.1} parent=1 // pred_check
      _
    $region15: #{tpu_custom_call.1} parent=1 // pred_check_branch
      %50 = sbr.rel (0) target = $region17
    $region16: #{tpu_custom_call.1} parent=1 // pred_region
      %s52 = ssub.s32 1024, 1024
      %53 = vsyncadd [#allocation9], %s52
      %s54 = sshll.u32 [#allocation8], 4
      %s55 = int_to_ptr.vmem [resolvable:$true] %s54
      %60 = dma.hbm_to_vmem [thread:$0]  %s3, 1024, %s55, [#allocation9], 64, 64, 4
    $region17: #{tpu_custom_call.1} parent=1 // pred_fallthru
      _
    // Predicated region
    $region18: #{tpu_custom_call.1} parent=1 // pred_check
      _
    $region19: #{tpu_custom_call.1} parent=1 // pred_check_branch
      %62 = sbr.rel (0) target = $region21
    $region20: #{tpu_custom_call.1} parent=1 // pred_region
      %63 = dma.done [#allocation3], 1024
    $region21: #{tpu_custom_call.1} parent=1 // pred_fallthru
      _
    // Predicated region
    $region22: #{tpu_custom_call.1} parent=1 // pred_check
      _
    $region23: #{tpu_custom_call.1} parent=1 // pred_check_branch
      %65 = sbr.rel (0) target = $region25
    $region24: #{tpu_custom_call.1} parent=1 // pred_region
      %66 = dma.done [#allocation6], 1024
    $region25: #{tpu_custom_call.1} parent=1 // pred_fallthru
      _
    // Predicated region
    $region26: #{tpu_custom_call.1} parent=1 // pred_check
      _
    $region27: #{tpu_custom_call.1} parent=1 // pred_check_branch
      %68 = sbr.rel (0) target = $region29
    $region28: #{tpu_custom_call.1} parent=1 // pred_region
      %69 = dma.done [#allocation6], 1024
    $region29: #{tpu_custom_call.1} parent=1 // pred_fallthru
      _
    // Predicated region
    $region30: #{tpu_custom_call.1} parent=1 // pred_check
      _
    $region31: #{tpu_custom_call.1} parent=1 // pred_check_branch
      %71 = sbr.rel (0) target = $region33
    $region32: #{tpu_custom_call.1} parent=1 // pred_region
      %72 = dma.done [#allocation9], 1024
    $region33: #{tpu_custom_call.1} parent=1 // pred_fallthru
      _
    %v74 = vld [vmem:[#allocation2] sm:$0xf]
    %v75 = vld [vmem:[#allocation2 + $0x4] sm:$0xf]
    %v76 = vld [vmem:[#allocation2 + $0x8] sm:$0xf]
    %v77 = vld [vmem:[#allocation2 + $0xc] sm:$0xf]
    %v78 = vld [vmem:[#allocation2 + $0x10] sm:$0xf]
    %v79 = vld [vmem:[#allocation2 + $0x14] sm:$0xf]
    %v80 = vld [vmem:[#allocation2 + $0x18] sm:$0xf]
    %v81 = vld [vmem:[#allocation2 + $0x1c] sm:$0xf]
    %v82 = vld [vmem:[#allocation2 + $0x20] sm:$0xf]
    %v83 = vld [vmem:[#allocation2 + $0x24] sm:$0xf]
    %v84 = vld [vmem:[#allocation2 + $0x28] sm:$0xf]
    %v85 = vld [vmem:[#allocation2 + $0x2c] sm:$0xf]
    %v86 = vld [vmem:[#allocation2 + $0x30] sm:$0xf]
    %v87 = vld [vmem:[#allocation2 + $0x34] sm:$0xf]
    %v88 = vld [vmem:[#allocation2 + $0x38] sm:$0xf]
    %v89 = vld [vmem:[#allocation2 + $0x3c] sm:$0xf]
    %v90 = vld [vmem:[#allocation7] sm:$0xf]
    %v91 = vld [vmem:[#allocation7 + $0x4] sm:$0xf]
    %v92 = vld [vmem:[#allocation7 + $0x8] sm:$0xf]
    %v93 = vld [vmem:[#allocation7 + $0xc] sm:$0xf]
    %v94 = vld [vmem:[#allocation7 + $0x10] sm:$0xf]
    %v95 = vld [vmem:[#allocation7 + $0x14] sm:$0xf]
    %v96 = vld [vmem:[#allocation7 + $0x18] sm:$0xf]
    %v97 = vld [vmem:[#allocation7 + $0x1c] sm:$0xf]
    %v98 = vld [vmem:[#allocation7 + $0x20] sm:$0xf]
    %v99 = vld [vmem:[#allocation7 + $0x24] sm:$0xf]
    %v100 = vld [vmem:[#allocation7 + $0x28] sm:$0xf]
    %v101 = vld [vmem:[#allocation7 + $0x2c] sm:$0xf]
    %v102 = vld [vmem:[#allocation7 + $0x30] sm:$0xf]
    %v103 = vld [vmem:[#allocation7 + $0x34] sm:$0xf]
    %v104 = vld [vmem:[#allocation7 + $0x38] sm:$0xf]
    %v105 = vld [vmem:[#allocation7 + $0x3c] sm:$0xf]
    %v106 = vld [vmem:[#allocation5] sm:$0xf]
    %v107 = vld [vmem:[#allocation5 + $0x4] sm:$0xf]
    %v108 = vld [vmem:[#allocation5 + $0x8] sm:$0xf]
    %v109 = vld [vmem:[#allocation5 + $0xc] sm:$0xf]
    %v110 = vld [vmem:[#allocation5 + $0x10] sm:$0xf]
    %v111 = vld [vmem:[#allocation5 + $0x14] sm:$0xf]
    %v112 = vld [vmem:[#allocation5 + $0x18] sm:$0xf]
    %v113 = vld [vmem:[#allocation5 + $0x1c] sm:$0xf]
    %v114 = vld [vmem:[#allocation5 + $0x20] sm:$0xf]
    %v115 = vld [vmem:[#allocation5 + $0x24] sm:$0xf]
    %v116 = vld [vmem:[#allocation5 + $0x28] sm:$0xf]
    %v117 = vld [vmem:[#allocation5 + $0x2c] sm:$0xf]
    %v118 = vld [vmem:[#allocation5 + $0x30] sm:$0xf]
    %v119 = vld [vmem:[#allocation5 + $0x34] sm:$0xf]
    %v120 = vld [vmem:[#allocation5 + $0x38] sm:$0xf]
    %v121 = vld [vmem:[#allocation5 + $0x3c] sm:$0xf]
    %v122 = vld [vmem:[#allocation8] sm:$0xf]
    %v123 = vld [vmem:[#allocation8 + $0x4] sm:$0xf]
    %v124 = vld [vmem:[#allocation8 + $0x8] sm:$0xf]
    %v125 = vld [vmem:[#allocation8 + $0xc] sm:$0xf]
    %v126 = vld [vmem:[#allocation8 + $0x10] sm:$0xf]
    %v127 = vld [vmem:[#allocation8 + $0x14] sm:$0xf]
    %v128 = vld [vmem:[#allocation8 + $0x18] sm:$0xf]
    %v129 = vld [vmem:[#allocation8 + $0x1c] sm:$0xf]
    %v130 = vld [vmem:[#allocation8 + $0x20] sm:$0xf]
    %v131 = vld [vmem:[#allocation8 + $0x24] sm:$0xf]
    %v132 = vld [vmem:[#allocation8 + $0x28] sm:$0xf]
    %v133 = vld [vmem:[#allocation8 + $0x2c] sm:$0xf]
    %v134 = vld [vmem:[#allocation8 + $0x30] sm:$0xf]
    %v135 = vld [vmem:[#allocation8 + $0x34] sm:$0xf]
    %v136 = vld [vmem:[#allocation8 + $0x38] sm:$0xf]
    %v137 = vld [vmem:[#allocation8 + $0x3c] sm:$0xf]
    %v154 = vunpack.c.l.b16 %v106
    %v155 = vunpack.c.l.b16 %v107
    %v156 = vunpack.c.l.b16 %v108
    %v157 = vunpack.c.l.b16 %v109
    %v158 = vunpack.c.l.b16 %v110
    %v159 = vunpack.c.l.b16 %v111
    %v160 = vunpack.c.l.b16 %v112
    %v161 = vunpack.c.l.b16 %v113
    %v162 = vunpack.c.l.b16 %v114
    %v163 = vunpack.c.l.b16 %v115
    %v164 = vunpack.c.l.b16 %v116
    %v165 = vunpack.c.l.b16 %v117
    %v166 = vunpack.c.l.b16 %v118
    %v167 = vunpack.c.l.b16 %v119
    %v168 = vunpack.c.l.b16 %v120
    %v169 = vunpack.c.l.b16 %v121
    %v170 = vpack.c.b16 %v155, %v154
    %v171 = vpack.c.b16 %v157, %v156
    %v172 = vpack.c.b16 %v159, %v158
    %v173 = vpack.c.b16 %v161, %v160
    %v174 = vpack.c.b16 %v163, %v162
    %v175 = vpack.c.b16 %v165, %v164
    %v176 = vpack.c.b16 %v167, %v166
    %v177 = vpack.c.b16 %v169, %v168
    %v202 = vunpack.c.l.b16 %v122
    %v203 = vunpack.c.l.b16 %v123
    %v204 = vunpack.c.l.b16 %v124
    %v205 = vunpack.c.l.b16 %v125
    %v206 = vunpack.c.l.b16 %v126
    %v207 = vunpack.c.l.b16 %v127
    %v208 = vunpack.c.l.b16 %v128
    %v209 = vunpack.c.l.b16 %v129
    %v210 = vunpack.c.l.b16 %v130
    %v211 = vunpack.c.l.b16 %v131
    %v212 = vunpack.c.l.b16 %v132
    %v213 = vunpack.c.l.b16 %v133
    %v214 = vunpack.c.l.b16 %v134
    %v215 = vunpack.c.l.b16 %v135
    %v216 = vunpack.c.l.b16 %v136
    %v217 = vunpack.c.l.b16 %v137
    %v218 = vpack.c.b16 %v203, %v202
    %v219 = vpack.c.b16 %v205, %v204
    %v220 = vpack.c.b16 %v207, %v206
    %v221 = vpack.c.b16 %v209, %v208
    %v222 = vpack.c.b16 %v211, %v210
    %v223 = vpack.c.b16 %v213, %v212
    %v224 = vpack.c.b16 %v215, %v214
    %v225 = vpack.c.b16 %v217, %v216
    %234 = vmatprep.subr.bf16.mxu0 0
    %235 = vmatpush1.bf16.msra.mxu0 %v218
    %236 = vmatprep.subr.bf16.mxu0 0
    %237 = vmatpush1.bf16.msra.mxu0 %v219
    %238 = vmatprep.subr.bf16.mxu0 0
    %239 = vmatpush1.bf16.msra.mxu0 %v220
    %240 = vmatprep.subr.bf16.mxu0 0
    %241 = vmatpush1.bf16.msra.mxu0 %v221
    %242 = vmatprep.subr.bf16.mxu0 0
    %243 = vmatpush1.bf16.msra.mxu0 %v222
    %244 = vmatprep.subr.bf16.mxu0 0
    %245 = vmatpush1.bf16.msra.mxu0 %v223
    %246 = vmatprep.subr.bf16.mxu0 0
    %247 = vmatpush1.bf16.msra.mxu0 %v224
    %248 = vmatprep.subr.bf16.mxu0 0
    %249 = vmatpush1.bf16.msra.mxu0 %v225
    %250 = vmatprep.subr.bf16.mxu0 0
    %251 = vmatpush1.bf16.msra.mxu0 0
    %252 = vmatprep.subr.bf16.mxu0 0
    %253 = vmatpush1.bf16.msra.mxu0 0
    %254 = vmatprep.subr.bf16.mxu0 0
    %255 = vmatpush1.bf16.msra.mxu0 0
    %256 = vmatprep.subr.bf16.mxu0 0
    %257 = vmatpush1.bf16.msra.mxu0 0
    %258 = vmatprep.subr.bf16.mxu0 0
    %259 = vmatpush1.bf16.msra.mxu0 0
    %260 = vmatprep.subr.bf16.mxu0 0
    %261 = vmatpush1.bf16.msra.mxu0 0
    %262 = vmatprep.subr.bf16.mxu0 0
    %263 = vmatpush1.bf16.msra.mxu0 0
    %264 = vmatprep.subr.bf16.mxu0 0
    %265 = vmatpush1.bf16.msra.mxu0 0
    %266 = vmatprep.mubr.bf16.mxu0 0
    %267 = vmatmul.mubr.bf16.gmra.mrb[0].mxu0 %v170
    %v268 = vpop.f32.mrb[0].mxu0
    %v269 = vadd.f32 0.0, %v268
    %v270 = vpop.f32.mrb[0].mxu0
    %v271 = vpop.f32.mrb[0].mxu0
    %v272 = vadd.f32 0.0, %v271
    %v273 = vpop.f32.mrb[0].mxu0
    %274 = vmatprep.mubr.bf16.mxu0 0
    %275 = vmatmul.mubr.bf16.gmra.mrb[0].mxu0 %v171
    %v276 = vpop.f32.mrb[0].mxu0
    %v277 = vadd.f32 0.0, %v276
    %v278 = vpop.f32.mrb[0].mxu0
    %v279 = vpop.f32.mrb[0].mxu0
    %v280 = vadd.f32 0.0, %v279
    %v281 = vpop.f32.mrb[0].mxu0
    %282 = vmatprep.mubr.bf16.mxu0 0
    %283 = vmatmul.mubr.bf16.gmra.mrb[0].mxu0 %v172
    %v284 = vpop.f32.mrb[0].mxu0
    %v285 = vadd.f32 0.0, %v284
    %v286 = vpop.f32.mrb[0].mxu0
    %v287 = vpop.f32.mrb[0].mxu0
    %v288 = vadd.f32 0.0, %v287
    %v289 = vpop.f32.mrb[0].mxu0
    %290 = vmatprep.mubr.bf16.mxu0 0
    %291 = vmatmul.mubr.bf16.gmra.mrb[0].mxu0 %v173
    %v292 = vpop.f32.mrb[0].mxu0
    %v293 = vadd.f32 0.0, %v292
    %v294 = vpop.f32.mrb[0].mxu0
    %v295 = vpop.f32.mrb[0].mxu0
    %v296 = vadd.f32 0.0, %v295
    %v297 = vpop.f32.mrb[0].mxu0
    %298 = vmatprep.mubr.bf16.mxu0 0
    %299 = vmatmul.mubr.bf16.gmra.mrb[0].mxu0 %v174
    %v300 = vpop.f32.mrb[0].mxu0
    %v301 = vadd.f32 0.0, %v300
    %v302 = vpop.f32.mrb[0].mxu0
    %v303 = vpop.f32.mrb[0].mxu0
    %v304 = vadd.f32 0.0, %v303
    %v305 = vpop.f32.mrb[0].mxu0
    %306 = vmatprep.mubr.bf16.mxu0 0
    %307 = vmatmul.mubr.bf16.gmra.mrb[0].mxu0 %v175
    %v308 = vpop.f32.mrb[0].mxu0
    %v309 = vadd.f32 0.0, %v308
    %v310 = vpop.f32.mrb[0].mxu0
    %v311 = vpop.f32.mrb[0].mxu0
    %v312 = vadd.f32 0.0, %v311
    %v313 = vpop.f32.mrb[0].mxu0
    %314 = vmatprep.mubr.bf16.mxu0 0
    %315 = vmatmul.mubr.bf16.gmra.mrb[0].mxu0 %v176
    %v316 = vpop.f32.mrb[0].mxu0
    %v317 = vadd.f32 0.0, %v316
    %v318 = vpop.f32.mrb[0].mxu0
    %v319 = vpop.f32.mrb[0].mxu0
    %v320 = vadd.f32 0.0, %v319
    %v321 = vpop.f32.mrb[0].mxu0
    %322 = vmatprep.mubr.bf16.mxu0 0
    %323 = vmatmul.mubr.bf16.gmra.mrb[0].mxu0 %v177
    %v324 = vpop.f32.mrb[0].mxu0
    %v325 = vadd.f32 0.0, %v324
    %v326 = vpop.f32.mrb[0].mxu0
    %v327 = vpop.f32.mrb[0].mxu0
    %v328 = vadd.f32 0.0, %v327
    %v329 = vpop.f32.mrb[0].mxu0
    %330 = vdwg.mxu0
    %v347 = vunpack.c.l.b16 %v74
    %v348 = vunpack.c.l.b16 %v75
    %v349 = vunpack.c.l.b16 %v76
    %v350 = vunpack.c.l.b16 %v77
    %v351 = vunpack.c.l.b16 %v78
    %v352 = vunpack.c.l.b16 %v79
    %v353 = vunpack.c.l.b16 %v80
    %v354 = vunpack.c.l.b16 %v81
    %v355 = vunpack.c.l.b16 %v82
    %v356 = vunpack.c.l.b16 %v83
    %v357 = vunpack.c.l.b16 %v84
    %v358 = vunpack.c.l.b16 %v85
    %v359 = vunpack.c.l.b16 %v86
    %v360 = vunpack.c.l.b16 %v87
    %v361 = vunpack.c.l.b16 %v88
    %v362 = vunpack.c.l.b16 %v89
    %v363 = vpack.c.b16 %v348, %v347
    %v364 = vpack.c.b16 %v350, %v349
    %v365 = vpack.c.b16 %v352, %v351
    %v366 = vpack.c.b16 %v354, %v353
    %v367 = vpack.c.b16 %v356, %v355
    %v368 = vpack.c.b16 %v358, %v357
    %v369 = vpack.c.b16 %v360, %v359
    %v370 = vpack.c.b16 %v362, %v361
    %v395 = vunpack.c.l.b16 %v90
    %v396 = vunpack.c.l.b16 %v91
    %v397 = vunpack.c.l.b16 %v92
    %v398 = vunpack.c.l.b16 %v93
    %v399 = vunpack.c.l.b16 %v94
    %v400 = vunpack.c.l.b16 %v95
    %v401 = vunpack.c.l.b16 %v96
    %v402 = vunpack.c.l.b16 %v97
    %v403 = vunpack.c.l.b16 %v98
    %v404 = vunpack.c.l.b16 %v99
    %v405 = vunpack.c.l.b16 %v100
    %v406 = vunpack.c.l.b16 %v101
    %v407 = vunpack.c.l.b16 %v102
    %v408 = vunpack.c.l.b16 %v103
    %v409 = vunpack.c.l.b16 %v104
    %v410 = vunpack.c.l.b16 %v105
    %v411 = vpack.c.b16 %v396, %v395
    %v412 = vpack.c.b16 %v398, %v397
    %v413 = vpack.c.b16 %v400, %v399
    %v414 = vpack.c.b16 %v402, %v401
    %v415 = vpack.c.b16 %v404, %v403
    %v416 = vpack.c.b16 %v406, %v405
    %v417 = vpack.c.b16 %v408, %v407
    %v418 = vpack.c.b16 %v410, %v409
    %427 = vmatprep.subr.bf16.mxu0 0
    %428 = vmatpush1.bf16.msra.mxu0 %v411
    %429 = vmatprep.subr.bf16.mxu0 0
    %430 = vmatpush1.bf16.msra.mxu0 %v412
    %431 = vmatprep.subr.bf16.mxu0 0
    %432 = vmatpush1.bf16.msra.mxu0 %v413
    %433 = vmatprep.subr.bf16.mxu0 0
    %434 = vmatpush1.bf16.msra.mxu0 %v414
    %435 = vmatprep.subr.bf16.mxu0 0
    %436 = vmatpush1.bf16.msra.mxu0 %v415
    %437 = vmatprep.subr.bf16.mxu0 0
    %438 = vmatpush1.bf16.msra.mxu0 %v416
    %439 = vmatprep.subr.bf16.mxu0 0
    %440 = vmatpush1.bf16.msra.mxu0 %v417
    %441 = vmatprep.subr.bf16.mxu0 0
    %442 = vmatpush1.bf16.msra.mxu0 %v418
    %443 = vmatprep.subr.bf16.mxu0 0
    %444 = vmatpush1.bf16.msra.mxu0 0
    %445 = vmatprep.subr.bf16.mxu0 0
    %446 = vmatpush1.bf16.msra.mxu0 0
    %447 = vmatprep.subr.bf16.mxu0 0
    %448 = vmatpush1.bf16.msra.mxu0 0
    %449 = vmatprep.subr.bf16.mxu0 0
    %450 = vmatpush1.bf16.msra.mxu0 0
    %451 = vmatprep.subr.bf16.mxu0 0
    %452 = vmatpush1.bf16.msra.mxu0 0
    %453 = vmatprep.subr.bf16.mxu0 0
    %454 = vmatpush1.bf16.msra.mxu0 0
    %455 = vmatprep.subr.bf16.mxu0 0
    %456 = vmatpush1.bf16.msra.mxu0 0
    %457 = vmatprep.subr.bf16.mxu0 0
    %458 = vmatpush1.bf16.msra.mxu0 0
    %459 = vmatprep.mubr.bf16.mxu0 0
    %460 = vmatmul.mubr.bf16.gmra.mrb[0].mxu0 %v363
    %v461 = vpop.f32.mrb[0].mxu0
    %v462 = vadd.f32 %v269, %v461
    %v463 = vpop.f32.mrb[0].mxu0
    %v464 = vpop.f32.mrb[0].mxu0
    %v465 = vadd.f32 %v272, %v464
    %v466 = vpop.f32.mrb[0].mxu0
    %467 = vmatprep.mubr.bf16.mxu0 0
    %468 = vmatmul.mubr.bf16.gmra.mrb[0].mxu0 %v364
    %v469 = vpop.f32.mrb[0].mxu0
    %v470 = vadd.f32 %v277, %v469
    %v471 = vpop.f32.mrb[0].mxu0
    %v472 = vpop.f32.mrb[0].mxu0
    %v473 = vadd.f32 %v280, %v472
    %v474 = vpop.f32.mrb[0].mxu0
    %475 = vmatprep.mubr.bf16.mxu0 0
    %476 = vmatmul.mubr.bf16.gmra.mrb[0].mxu0 %v365
    %v477 = vpop.f32.mrb[0].mxu0
    %v478 = vadd.f32 %v285, %v477
    %v479 = vpop.f32.mrb[0].mxu0
    %v480 = vpop.f32.mrb[0].mxu0
    %v481 = vadd.f32 %v288, %v480
    %v482 = vpop.f32.mrb[0].mxu0
    %483 = vmatprep.mubr.bf16.mxu0 0
    %484 = vmatmul.mubr.bf16.gmra.mrb[0].mxu0 %v366
    %v485 = vpop.f32.mrb[0].mxu0
    %v486 = vadd.f32 %v293, %v485
    %v487 = vpop.f32.mrb[0].mxu0
    %v488 = vpop.f32.mrb[0].mxu0
    %v489 = vadd.f32 %v296, %v488
    %v490 = vpop.f32.mrb[0].mxu0
    %491 = vmatprep.mubr.bf16.mxu0 0
    %492 = vmatmul.mubr.bf16.gmra.mrb[0].mxu0 %v367
    %v493 = vpop.f32.mrb[0].mxu0
    %v494 = vadd.f32 %v301, %v493
    %v495 = vpop.f32.mrb[0].mxu0
    %v496 = vpop.f32.mrb[0].mxu0
    %v497 = vadd.f32 %v304, %v496
    %v498 = vpop.f32.mrb[0].mxu0
    %499 = vmatprep.mubr.bf16.mxu0 0
    %500 = vmatmul.mubr.bf16.gmra.mrb[0].mxu0 %v368
    %v501 = vpop.f32.mrb[0].mxu0
    %v502 = vadd.f32 %v309, %v501
    %v503 = vpop.f32.mrb[0].mxu0
    %v504 = vpop.f32.mrb[0].mxu0
    %v505 = vadd.f32 %v312, %v504
    %v506 = vpop.f32.mrb[0].mxu0
    %507 = vmatprep.mubr.bf16.mxu0 0
    %508 = vmatmul.mubr.bf16.gmra.mrb[0].mxu0 %v369
    %v509 = vpop.f32.mrb[0].mxu0
    %v510 = vadd.f32 %v317, %v509
    %v511 = vpop.f32.mrb[0].mxu0
    %v512 = vpop.f32.mrb[0].mxu0
    %v513 = vadd.f32 %v320, %v512
    %v514 = vpop.f32.mrb[0].mxu0
    %515 = vmatprep.mubr.bf16.mxu0 0
    %516 = vmatmul.mubr.bf16.gmra.mrb[0].mxu0 %v370
    %v517 = vpop.f32.mrb[0].mxu0
    %v518 = vadd.f32 %v325, %v517
    %v519 = vpop.f32.mrb[0].mxu0
    %v520 = vpop.f32.mrb[0].mxu0
    %v521 = vadd.f32 %v328, %v520
    %v522 = vpop.f32.mrb[0].mxu0
    %523 = vdwg.mxu0
    %v524 = vmax.f32 %v462, 0.0
    %v525 = vmax.f32 %v465, 0.0
    %v526 = vmax.f32 %v470, 0.0
    %v527 = vmax.f32 %v473, 0.0
    %v528 = vmax.f32 %v478, 0.0
    %v529 = vmax.f32 %v481, 0.0
    %v530 = vmax.f32 %v486, 0.0
    %v531 = vmax.f32 %v489, 0.0
    %v532 = vmax.f32 %v494, 0.0
    %v533 = vmax.f32 %v497, 0.0
    %v534 = vmax.f32 %v502, 0.0
    %v535 = vmax.f32 %v505, 0.0
    %v536 = vmax.f32 %v510, 0.0
    %v537 = vmax.f32 %v513, 0.0
    %v538 = vmax.f32 %v518, 0.0
    %v539 = vmax.f32 %v521, 0.0
    %v540 = vpack.c.bf16 %v525, %v524
    %v541 = vpack.c.bf16 %v527, %v526
    %v542 = vpack.c.bf16 %v529, %v528
    %v543 = vpack.c.bf16 %v531, %v530
    %v544 = vpack.c.bf16 %v533, %v532
    %v545 = vpack.c.bf16 %v535, %v534
    %v546 = vpack.c.bf16 %v537, %v536
    %v547 = vpack.c.bf16 %v539, %v538
    %v556 = vunpack.c.l.b16 %v540
    %v557 = vunpack.c.h.b16 %v540
    %v558 = vunpack.c.l.b16 %v541
    %v559 = vunpack.c.h.b16 %v541
    %v560 = vunpack.c.l.b16 %v542
    %v561 = vunpack.c.h.b16 %v542
    %v562 = vunpack.c.l.b16 %v543
    %v563 = vunpack.c.h.b16 %v543
    %v564 = vunpack.c.l.b16 %v544
    %v565 = vunpack.c.h.b16 %v544
    %v566 = vunpack.c.l.b16 %v545
    %v567 = vunpack.c.h.b16 %v545
    %v568 = vunpack.c.l.b16 %v546
    %v569 = vunpack.c.h.b16 %v546
    %v570 = vunpack.c.l.b16 %v547
    %v571 = vunpack.c.h.b16 %v547
    %v572 = vpack.c.b16 %v556, %v556
    %v573 = vpack.c.b16 %v557, %v557
    %v574 = vpack.c.b16 %v558, %v558
    %v575 = vpack.c.b16 %v559, %v559
    %v576 = vpack.c.b16 %v560, %v560
    %v577 = vpack.c.b16 %v561, %v561
    %v578 = vpack.c.b16 %v562, %v562
    %v579 = vpack.c.b16 %v563, %v563
    %v580 = vpack.c.b16 %v564, %v564
    %v581 = vpack.c.b16 %v565, %v565
    %v582 = vpack.c.b16 %v566, %v566
    %v583 = vpack.c.b16 %v567, %v567
    %v584 = vpack.c.b16 %v568, %v568
    %v585 = vpack.c.b16 %v569, %v569
    %v586 = vpack.c.b16 %v570, %v570
    %v587 = vpack.c.b16 %v571, %v571
    %604 = vst [vmem:[#allocation10] sm:$0xf] %v572
    %605 = vst [vmem:[#allocation10 + $0x4] sm:$0xf] %v573
    %606 = vst [vmem:[#allocation10 + $0x8] sm:$0xf] %v574
    %607 = vst [vmem:[#allocation10 + $0xc] sm:$0xf] %v575
    %608 = vst [vmem:[#allocation10 + $0x10] sm:$0xf] %v576
    %609 = vst [vmem:[#allocation10 + $0x14] sm:$0xf] %v577
    %610 = vst [vmem:[#allocation10 + $0x18] sm:$0xf] %v578
    %611 = vst [vmem:[#allocation10 + $0x1c] sm:$0xf] %v579
    %612 = vst [vmem:[#allocation10 + $0x20] sm:$0xf] %v580
    %613 = vst [vmem:[#allocation10 + $0x24] sm:$0xf] %v581
    %614 = vst [vmem:[#allocation10 + $0x28] sm:$0xf] %v582
    %615 = vst [vmem:[#allocation10 + $0x2c] sm:$0xf] %v583
    %616 = vst [vmem:[#allocation10 + $0x30] sm:$0xf] %v584
    %617 = vst [vmem:[#allocation10 + $0x34] sm:$0xf] %v585
    %618 = vst [vmem:[#allocation10 + $0x38] sm:$0xf] %v586
    %619 = vst [vmem:[#allocation10 + $0x3c] sm:$0xf] %v587
    // Predicated region
    $region34: #{tpu_custom_call.1} parent=1 // pred_check
      _
    $region35: #{tpu_custom_call.1} parent=1 // pred_check_branch
      %621 = sbr.rel (0) target = $region37
    $region36: #{tpu_custom_call.1} parent=1 // pred_region
      %s623 = ssub.s32 1024, 1024
      %624 = vsyncadd [#allocation4], %s623
      %s625 = sshll.u32 [#allocation10], 4
      %s626 = int_to_ptr.vmem [resolvable:$true] %s625
      %631 = dma.vmem_to_hbm [thread:$0]  %s626, 1024, %s4, [#allocation4], 64, 64, 4
    $region37: #{tpu_custom_call.1} parent=1 // pred_fallthru
      _
    // Predicated region
    $region38: #{tpu_custom_call.1} parent=1 // pred_check
      _
    $region39: #{tpu_custom_call.1} parent=1 // pred_check_branch
      %633 = sbr.rel (0) target = $region41
    $region40: #{tpu_custom_call.1} parent=1 // pred_region
      %634 = dma.done [#allocation4], 1024
    $region41: #{tpu_custom_call.1} parent=1 // pred_fallthru
      _
    %635 = vsyncpa [#allocation3], 1
    %636 = vsyncpa [#allocation6], 1
    %637 = vsyncpa [#allocation9], 1
    %638 = vsyncpa [#allocation4], 1

</llo_original>
